<compile_context>
chip_gen: v6e
topology: v6e:2x2x1
jax: 0.10.0
libtpu: 0.0.40
codegen_flags: <defaults>
</compile_context>

<pallas_src>
import math
import jax
import jax.numpy as jnp
from jax.experimental import pallas as pl
from jax.experimental.pallas import tpu as pltpu

# ----------------------- configuration (module defaults) -----------------------
N_NODES = 16
NUM_FEATS = 6
PE_CHANNELS = 4
HIDDEN = 4                      # hidden_channels
CHANNELS = 2 * HIDDEN           # GPSConv channels (hidden_channels *= 2)
HEADS = 1                       # num_attention_heads
HEAD_DIM = CHANNELS // HEADS
NUM_LAYERS = 1
NUM_CLASSES = 3                 # non-binary -> output dim = num_classes, logits
LN_EPS = 1e-5
BN_EPS = 1e-5
LANE = 128

IN_DIM = NUM_FEATS + PE_CHANNELS     # raw [x|pe] width = 10
EMB_K = 16                           # padded contracting width for embed matmul
P_ROWS = 16                          # param slab rows (>= 2*CHANNELS, EMB_K)

# ------------------ packed-parameter layout (one 128-lane tile / matrix) --------
OUT_TILE = 0                         # (C,128)  head weight, lane-dense
EMB_TILE = 1                         # (EMB_K,C) block-diag [w_in | w_pe]
LAYER0_TILE = 2
TILES_PER_LAYER = 3                  # fused [gcn|q|k|vo] , mlp1 , mlp2*bn3_s
VEC_TILE = LAYER0_TILE + TILES_PER_LAYER * NUM_LAYERS
P_COLS = (VEC_TILE + 1) * LANE
VEC_COL = VEC_TILE * LANE            # lane-tile holding all bias / LN vectors

VEC_LAYER0_ROW = 4                   # rows 0..3 = embed bias / LN / pe-mask
VEC_ROWS_PER_LAYER = 6
HEAD_BIAS_ROW = VEC_LAYER0_ROW + VEC_ROWS_PER_LAYER * NUM_LAYERS

# ------------------ activation slab: tile 0 = [x|pe|0], tile 1 = A_hat ----------
A_COL = LANE
ACT_COLS = 2 * LANE


# ------------------------------- fused Pallas kernel ----------------------------
def gps_fused_kernel(act_ref, p_ref, out_ref):
    def vec(r, width):
        # (1, width) row of the (tile-aligned) vector tile
        return p_ref[r:r + 1, VEC_COL:VEC_COL + width]

    xpe = act_ref[0:N_NODES, 0:EMB_K]                  # (N, 16)  zero-padded [x|pe|0]
    a_hat = act_ref[0:N_NODES, A_COL:A_COL + N_NODES]  # (N, N)   normalized adjacency

    # ---- embed: block-diagonal [w_in | w_pe] matmul, LayerNorm on pe lanes ----
    ecol = EMB_TILE * LANE
    w_emb = p_ref[0:EMB_K, ecol:ecol + CHANNELS]       # (16, C)
    h = jnp.dot(xpe, w_emb, preferred_element_type=jnp.float32) + vec(0, CHANNELS)

    ln_g = vec(1, CHANNELS)
    ln_b = vec(2, CHANNELS)
    pe_mask = vec(3, CHANNELS)                          # 1.0 on pe lanes, else 0.0
    mu = jnp.sum(h * pe_mask, axis=-1, keepdims=True) * (1.0 / HIDDEN)
    cen = h - mu
    var = jnp.sum(cen * cen * pe_mask, axis=-1, keepdims=True) * (1.0 / HIDDEN)
    h_ln = cen * jax.lax.rsqrt(var + LN_EPS) * ln_g + ln_b
    h = h + pe_mask * (h_ln - h)                        # x lanes untouched (mask is 0/1)

    # NUM_LAYERS is a small static constant -> Python loop unrolls at trace time.
    for layer in range(NUM_LAYERS):
        t = LAYER0_TILE + TILES_PER_LAYER * layer
        fcol, m1col, m2col = t * LANE, (t + 1) * LANE, (t + 2) * LANE
        vb = VEC_LAYER0_ROW + VEC_ROWS_PER_LAYER * layer

        w_fused = p_ref[0:CHANNELS, fcol:fcol + 4 * CHANNELS]        # [gcn*s1|q/sqrt(d)|k|vo*s2]
        w_m1 = p_ref[0:CHANNELS, m1col:m1col + 2 * CHANNELS]
        w_m2 = p_ref[0:2 * CHANNELS, m2col:m2col + CHANNELS]         # already * bn3_s

        # single fused projection: one (N,C)@(C,4C) matmul instead of four
        proj = jnp.dot(h, w_fused, preferred_element_type=jnp.float32) \
            + vec(vb + 0, 4 * CHANNELS)                # bias = [0 | b_q/sqrt(d) | b_k | 0]
        xw = proj[:, 0:CHANNELS]
        q = proj[:, CHANNELS:2 * CHANNELS]
        k = proj[:, 2 * CHANNELS:3 * CHANNELS]
        vv = proj[:, 3 * CHANNELS:4 * CHANNELS]

        # ---- global self-attention (heads=1, scale pre-folded into w_q/b_q) ----
        # TODO(synk): HEADS>1 would need per-head slicing / a layout-aware concat.
        s = jnp.dot(q, k.T, preferred_element_type=jnp.float32)
        s = s - jnp.max(s, axis=-1, keepdims=True)
        pexp = jnp.exp(s)
        pattn = pexp * pl.reciprocal(jnp.sum(pexp, axis=-1, keepdims=True), approx=True)
        attn = jnp.dot(pattn, vv, preferred_element_type=jnp.float32)  # w_o folded in

        # ---- local MPNN aggregation (bn1_s folded into w_gcn columns) ----
        loc = jnp.dot(a_hat, xw, preferred_element_type=jnp.float32)

        # out = h_local + h_attn with all residual/bias/BN affine terms collapsed:
        #   h*(bn1_s+bn2_s) + (b_gcn*bn1_s + (b_v@w_o+b_o)*bn2_s + bn1_b + bn2_b)
        out = loc + attn + h * vec(vb + 1, CHANNELS) + vec(vb + 2, CHANNELS)

        # ---- MLP + residual + folded BatchNorm3 ----
        mlp = jnp.dot(out, w_m1, preferred_element_type=jnp.float32) \
            + vec(vb + 3, 2 * CHANNELS)
        mlp = jnp.maximum(mlp, 0.0)
        mlp = jnp.dot(mlp, w_m2, preferred_element_type=jnp.float32)   # bn3_s folded
        h = out * vec(vb + 4, CHANNELS) + mlp + vec(vb + 5, CHANNELS)  # + b_mlp2*s3 + bn3_b

    # ---- output head, lane-dense: (C,128) padded weight -> unmasked stores ----
    w_out = p_ref[0:CHANNELS, 0:LANE]
    b_out = p_ref[HEAD_BIAS_ROW:HEAD_BIAS_ROW + 1, VEC_COL:VEC_COL + LANE]
    out_ref[...] = jnp.dot(h, w_out, preferred_element_type=jnp.float32) + b_out


# ------------------------------- forward wrapper --------------------------------
@jax.jit
def gps_forward(x, pe, a_hat, param_slab):
    # single activation slab: lane-tile 0 = [x | pe | 0], lane-tile 1 = A_hat
    act = jnp.zeros((N_NODES, ACT_COLS), jnp.float32)
    act = act.at[:, :NUM_FEATS].set(x).at[:, NUM_FEATS:IN_DIM].set(pe)
    act = act.at[:, A_COL:A_COL + N_NODES].set(a_hat)

    padded = pl.pallas_call(
        gps_fused_kernel,
        out_shape=jax.ShapeDtypeStruct((N_NODES, LANE), jnp.float32),
        in_specs=[pl.BlockSpec(memory_space=pltpu.MemorySpace.VMEM)] * 2,
        out_specs=pl.BlockSpec(memory_space=pltpu.MemorySpace.VMEM),
    )(act, param_slab)
    return padded[:, :NUM_CLASSES]


# -------------------------- parameter packing (one-time) -------------------------
def pack_params(p):
    """Pack all parameters into ONE slab (16, 768); every matrix starts at a
    128-lane tile boundary; all folds (w_v@w_o, 1/sqrt(d), BatchNorm scales)
    are done here so the kernel's serial matmul chain is minimal."""
    P = jnp.zeros((P_ROWS, P_COLS), jnp.float32)

    # head weight, lane-dense at tile 0
    P = P.at[0:CHANNELS, 0:NUM_CLASSES].set(p["w_out"])
    # block-diagonal embed weight at tile 1
    ecol = EMB_TILE * LANE
    P = P.at[0:NUM_FEATS, ecol:ecol + HIDDEN].set(p["w_in"])
    P = P.at[NUM_FEATS:IN_DIM, ecol + HIDDEN:ecol + CHANNELS].set(p["w_pe"])

    # embed vectors (vector tile, lane-aligned at VEC_COL)
    P = P.at[0:1, VEC_COL:VEC_COL + HIDDEN].set(p["b_in"])
    P = P.at[0:1, VEC_COL + HIDDEN:VEC_COL + CHANNELS].set(p["b_pe"])
    P = P.at[1:2, VEC_COL + HIDDEN:VEC_COL + CHANNELS].set(p["ln_g"])
    P = P.at[2:3, VEC_COL + HIDDEN:VEC_COL + CHANNELS].set(p["ln_b"])
    P = P.at[3:4, VEC_COL + HIDDEN:VEC_COL + CHANNELS].set(
        jnp.ones((1, HIDDEN), jnp.float32))                         # pe mask
    P = P.at[HEAD_BIAS_ROW:HEAD_BIAS_ROW + 1,
             VEC_COL:VEC_COL + NUM_CLASSES].set(p["b_out"])

    inv_sqrt_d = 1.0 / math.sqrt(HEAD_DIM)
    for l, lp in enumerate(p["layers"]):
        t = LAYER0_TILE + TILES_PER_LAYER * l
        fcol, m1col, m2col = t * LANE, (t + 1) * LANE, (t + 2) * LANE
        vb = VEC_LAYER0_ROW + VEC_ROWS_PER_LAYER * l

        w_vo = lp["w_v"] @ lp["w_o"]                                 # (C,C) fold
        b_vo = lp["b_v"] @ lp["w_o"] + lp["b_o"]                     # (1,C)

        w_fused = jnp.concatenate(
            [lp["w_gcn"] * lp["bn1_s"],           # bn1_s folded (column scale)
             lp["w_q"] * inv_sqrt_d,              # attention scale folded
             lp["w_k"],
             w_vo * lp["bn2_s"]], axis=1)         # bn2_s folded
        P = P.at[0:CHANNELS, fcol:fcol + 4 * CHANNELS].set(w_fused)
        P = P.at[0:CHANNELS, m1col:m1col + 2 * CHANNELS].set(lp["w_mlp1"])
        P = P.at[0:2 * CHANNELS, m2col:m2col + CHANNELS].set(
            lp["w_mlp2"] * lp["bn3_s"])           # bn3_s folded

        # fused projection bias: [0 | b_q/sqrt(d) | b_k | 0]
        P = P.at[vb:vb + 1, VEC_COL + CHANNELS:VEC_COL + 2 * CHANNELS].set(
            lp["b_q"] * inv_sqrt_d)
        P = P.at[vb:vb + 1, VEC_COL + 2 * CHANNELS:VEC_COL + 3 * CHANNELS].set(lp["b_k"])

        bn12_s = lp["bn1_s"] + lp["bn2_s"]
        comb_b = (lp["b_gcn"] * lp["bn1_s"] + lp["bn1_b"]
                  + b_vo * lp["bn2_s"] + lp["bn2_b"])
        P = P.at[vb + 1:vb + 2, VEC_COL:VEC_COL + CHANNELS].set(bn12_s)
        P = P.at[vb + 2:vb + 3, VEC_COL:VEC_COL + CHANNELS].set(comb_b)
        P = P.at[vb + 3:vb + 4, VEC_COL:VEC_COL + 2 * CHANNELS].set(lp["b_mlp1"])
        P = P.at[vb + 4:vb + 5, VEC_COL:VEC_COL + CHANNELS].set(lp["bn3_s"])
        P = P.at[vb + 5:vb + 6, VEC_COL:VEC_COL + CHANNELS].set(
            lp["b_mlp2"] * lp["bn3_s"] + lp["bn3_b"])
    return P


# ------------------------ plain-JAX reference (for checking) ---------------------
def gps_forward_ref(x, pe, a_hat, params):
    p = params
    pe_h = pe @ p["w_pe"] + p["b_pe"]
    mu = pe_h.mean(-1, keepdims=True)
    var = ((pe_h - mu) ** 2).mean(-1, keepdims=True)
    pe_h = (pe_h - mu) / jnp.sqrt(var + LN_EPS) * p["ln_g"] + p["ln_b"]
    h = jnp.concatenate([x @ p["w_in"] + p["b_in"], pe_h], axis=1)
    d = CHANNELS // HEADS
    for lp in p["layers"]:
        h_loc = a_hat @ (h @ lp["w_gcn"]) + lp["b_gcn"] + h
        h_loc = h_loc * lp["bn1_s"] + lp["bn1_b"]
        q = h @ lp["w_q"] + lp["b_q"]
        k = h @ lp["w_k"] + lp["b_k"]
        v = h @ lp["w_v"] + lp["b_v"]
        outs = []
        for hh in range(HEADS):
            sl = slice(hh * d, (hh + 1) * d)
            s = (q[:, sl] @ k[:, sl].T) / math.sqrt(d)
            outs.append(jax.nn.softmax(s, axis=-1) @ v[:, sl])
        attn = jnp.concatenate(outs, axis=1)
        h_att = attn @ lp["w_o"] + lp["b_o"] + h
        h_att = h_att * lp["bn2_s"] + lp["bn2_b"]
        out = h_loc + h_att
        mlp = jnp.maximum(out @ lp["w_mlp1"] + lp["b_mlp1"], 0.0) @ lp["w_mlp2"] + lp["b_mlp2"]
        h = (out + mlp) * lp["bn3_s"] + lp["bn3_b"]
    return h @ p["w_out"] + p["b_out"]


# ------------------------------- glue / setup ------------------------------------
def build_gcn_adj(edge_index, num_nodes):
    """Dense A_hat = D^-1/2 (A + I) D^-1/2 matching torch_geometric gcn_norm.
    NOTE: assumes edge_index has no pre-existing self-loops / duplicate edges."""
    src, dst = edge_index
    a = jnp.zeros((num_nodes, num_nodes), jnp.float32).at[dst, src].add(1.0)
    a = a + jnp.eye(num_nodes, dtype=jnp.float32)          # self-loops
    deg = jnp.sum(a, axis=1)
    dinv = jax.lax.rsqrt(deg)
    return a * dinv[:, None] * dinv[None, :]


def init_params(key):
    """Deterministic synthetic init.  Biases/vectors stored as (1, dim).
    BatchNorm1d (eval mode) is folded into per-channel scale/shift."""
    ks = iter(jax.random.split(key, 64))

    def mat(shape, scale=0.2):
        return scale * jax.random.normal(next(ks), shape, dtype=jnp.float32)

    def vec(dim, scale=0.1):
        return scale * jax.random.normal(next(ks), (1, dim), dtype=jnp.float32)

    def bn_fold(dim):
        gamma = 1.0 + 0.1 * jax.random.normal(next(ks), (1, dim), jnp.float32)
        beta = 0.1 * jax.random.normal(next(ks), (1, dim), jnp.float32)
        mean = 0.1 * jax.random.normal(next(ks), (1, dim), jnp.float32)
        var = 1.0 + 0.1 * jnp.abs(jax.random.normal(next(ks), (1, dim), jnp.float32))
        scale = gamma / jnp.sqrt(var + BN_EPS)
        shift = beta - mean * scale
        return scale, shift

    params = {
        "w_pe": mat((PE_CHANNELS, HIDDEN)), "b_pe": vec(HIDDEN),
        "ln_g": 1.0 + vec(HIDDEN), "ln_b": vec(HIDDEN),
        "w_in": mat((NUM_FEATS, HIDDEN)), "b_in": vec(HIDDEN),
        "layers": [],
        "w_out": mat((CHANNELS, NUM_CLASSES)), "b_out": vec(NUM_CLASSES),
    }
    for _ in range(NUM_LAYERS):
        bn1 = bn_fold(CHANNELS)
        bn2 = bn_fold(CHANNELS)
        bn3 = bn_fold(CHANNELS)
        params["layers"].append({
            "w_gcn": mat((CHANNELS, CHANNELS)), "b_gcn": vec(CHANNELS),
            "w_q": mat((CHANNELS, CHANNELS)), "b_q": vec(CHANNELS),
            "w_k": mat((CHANNELS, CHANNELS)), "b_k": vec(CHANNELS),
            "w_v": mat((CHANNELS, CHANNELS)), "b_v": vec(CHANNELS),
            "w_o": mat((CHANNELS, CHANNELS)), "b_o": vec(CHANNELS),
            "bn1_s": bn1[0], "bn1_b": bn1[1],
            "bn2_s": bn2[0], "bn2_b": bn2[1],
            "w_mlp1": mat((CHANNELS, 2 * CHANNELS)), "b_mlp1": vec(2 * CHANNELS),
            "w_mlp2": mat((2 * CHANNELS, CHANNELS)), "b_mlp2": vec(CHANNELS),
            "bn3_s": bn3[0], "bn3_b": bn3[1],
        })
    return params


if __name__ == "__main__":
    key = jax.random.PRNGKey(0)
    kx, kpe, kparam = jax.random.split(key, 3)

    x = jax.random.normal(kx, (N_NODES, NUM_FEATS), dtype=jnp.float32)
    pe = jax.random.normal(kpe, (N_NODES, PE_CHANNELS), dtype=jnp.float32)

    # deterministic undirected ring graph (both directions)
    idx = jnp.arange(N_NODES)
    src = jnp.concatenate([idx, (idx + 1) % N_NODES]).astype(jnp.int32)
    dst = jnp.concatenate([(idx + 1) % N_NODES, idx]).astype(jnp.int32)
    edge_index = jnp.stack([src, dst])

    a_hat = build_gcn_adj(edge_index, N_NODES)
    params = init_params(kparam)
    param_slab = pack_params(params)                    # one-time packing -> 1 slab

    logits = gps_forward(x, pe, a_hat, param_slab)
    logits = jax.block_until_ready(logits)

    ref = gps_forward_ref(x, pe, a_hat, params)
    assert logits.shape == (N_NODES, NUM_CLASSES)
    # tolerance accounts for pl.reciprocal(approx=True) in the softmax denominator
    assert bool(jnp.allclose(logits, ref, atol=5e-3, rtol=5e-3)), "Pallas vs reference mismatch"
    print("KERNEL_OK")
</pallas_src>

<mosaic_0001>
module attributes {stable_mosaic.version = 11 : i64} {
  func.func @gps_fused_kernel(%arg0: memref<16x256xf32, #tpu.memory_space<vmem>>, %arg1: memref<16x768xf32, #tpu.memory_space<vmem>>, %arg2: memref<16x128xf32, #tpu.memory_space<vmem>>) attributes {dimension_semantics = [], scalar_prefetch = 0 : i64, scratch_operands = 0 : i64, tpu.core_type = #tpu.core_type<tc>} {
    %c0 = arith.constant 0 : index
    %c0_0 = arith.constant 0 : index
    %0 = vector.load %arg0[%c0, %c0_0] : memref<16x256xf32, #tpu.memory_space<vmem>>, vector<16x16xf32>
    %c0_1 = arith.constant 0 : index
    %c128 = arith.constant 128 : index
    %1 = vector.load %arg0[%c0_1, %c128] : memref<16x256xf32, #tpu.memory_space<vmem>>, vector<16x16xf32>
    %c0_2 = arith.constant 0 : index
    %c128_3 = arith.constant 128 : index
    %2 = vector.load %arg1[%c0_2, %c128_3] : memref<16x768xf32, #tpu.memory_space<vmem>>, vector<16x8xf32>
    %cst = arith.constant dense<0.000000e+00> : vector<16x8xf32>
    %3 = tpu.matmul %0, %2, %cst {dimension_numbers = #tpu.dot_dimension_numbers<[1], [0], [0], [1], [0, 0, 1, 1], [], []>} : vector<16x16xf32>, vector<16x8xf32>, vector<16x8xf32> -> vector<16x8xf32>
    %c0_4 = arith.constant 0 : index
    %c640 = arith.constant 640 : index
    %4 = vector.load %arg1[%c0_4, %c640] : memref<16x768xf32, #tpu.memory_space<vmem>>, vector<1x8xf32>
    %5 = vector.broadcast %4 : vector<1x8xf32> to vector<16x8xf32>
    %6 = arith.addf %3, %5 : vector<16x8xf32>
    %c1 = arith.constant 1 : index
    %c640_5 = arith.constant 640 : index
    %7 = vector.load %arg1[%c1, %c640_5] : memref<16x768xf32, #tpu.memory_space<vmem>>, vector<1x8xf32>
    %c2 = arith.constant 2 : index
    %c640_6 = arith.constant 640 : index
    %8 = vector.load %arg1[%c2, %c640_6] : memref<16x768xf32, #tpu.memory_space<vmem>>, vector<1x8xf32>
    %c3 = arith.constant 3 : index
    %c640_7 = arith.constant 640 : index
    %9 = vector.load %arg1[%c3, %c640_7] : memref<16x768xf32, #tpu.memory_space<vmem>>, vector<1x8xf32>
    %10 = vector.broadcast %9 : vector<1x8xf32> to vector<16x8xf32>
    %11 = arith.mulf %6, %10 : vector<16x8xf32>
    %cst_8 = arith.constant dense<0.000000e+00> : vector<16xf32>
    %12 = vector.multi_reduction <add>, %11, %cst_8 [1] : vector<16x8xf32> to vector<16xf32>
    %13 = vector.shape_cast %12 : vector<16xf32> to vector<16x1xf32>
    %cst_9 = arith.constant 2.500000e-01 : f32
    %14 = vector.broadcast %cst_9 : f32 to vector<16x1xf32>
    %15 = arith.mulf %13, %14 : vector<16x1xf32>
    %16 = vector.broadcast %15 : vector<16x1xf32> to vector<16x8xf32>
    %17 = arith.subf %6, %16 : vector<16x8xf32>
    %18 = arith.mulf %17, %17 : vector<16x8xf32>
    %19 = vector.broadcast %9 : vector<1x8xf32> to vector<16x8xf32>
    %20 = arith.mulf %18, %19 : vector<16x8xf32>
    %cst_10 = arith.constant dense<0.000000e+00> : vector<16xf32>
    %21 = vector.multi_reduction <add>, %20, %cst_10 [1] : vector<16x8xf32> to vector<16xf32>
    %22 = vector.shape_cast %21 : vector<16xf32> to vector<16x1xf32>
    %cst_11 = arith.constant 2.500000e-01 : f32
    %23 = vector.broadcast %cst_11 : f32 to vector<16x1xf32>
    %24 = arith.mulf %22, %23 : vector<16x1xf32>
    %cst_12 = arith.constant 9.99999974E-6 : f32
    %25 = vector.broadcast %cst_12 : f32 to vector<16x1xf32>
    %26 = arith.addf %24, %25 : vector<16x1xf32>
    %27 = math.rsqrt %26 : vector<16x1xf32>
    %28 = vector.broadcast %27 : vector<16x1xf32> to vector<16x8xf32>
    %29 = arith.mulf %17, %28 : vector<16x8xf32>
    %30 = vector.broadcast %7 : vector<1x8xf32> to vector<16x8xf32>
    %31 = arith.mulf %29, %30 : vector<16x8xf32>
    %32 = vector.broadcast %8 : vector<1x8xf32> to vector<16x8xf32>
    %33 = arith.addf %31, %32 : vector<16x8xf32>
    %34 = arith.subf %33, %6 : vector<16x8xf32>
    %35 = vector.broadcast %9 : vector<1x8xf32> to vector<16x8xf32>
    %36 = arith.mulf %35, %34 : vector<16x8xf32>
    %37 = arith.addf %6, %36 : vector<16x8xf32>
    %c0_13 = arith.constant 0 : index
    %c256 = arith.constant 256 : index
    %38 = vector.load %arg1[%c0_13, %c256] : memref<16x768xf32, #tpu.memory_space<vmem>>, vector<8x32xf32>
    %c0_14 = arith.constant 0 : index
    %c384 = arith.constant 384 : index
    %39 = vector.load %arg1[%c0_14, %c384] : memref<16x768xf32, #tpu.memory_space<vmem>>, vector<8x16xf32>
    %c0_15 = arith.constant 0 : index
    %c512 = arith.constant 512 : index
    %40 = vector.load %arg1[%c0_15, %c512] : memref<16x768xf32, #tpu.memory_space<vmem>>, vector<16x8xf32>
    %cst_16 = arith.constant dense<0.000000e+00> : vector<16x32xf32>
    %41 = tpu.matmul %37, %38, %cst_16 {dimension_numbers = #tpu.dot_dimension_numbers<[1], [0], [0], [1], [0, 0, 1, 1], [], []>} : vector<16x8xf32>, vector<8x32xf32>, vector<16x32xf32> -> vector<16x32xf32>
    %c4 = arith.constant 4 : index
    %c640_17 = arith.constant 640 : index
    %42 = vector.load %arg1[%c4, %c640_17] : memref<16x768xf32, #tpu.memory_space<vmem>>, vector<1x32xf32>
    %43 = vector.broadcast %42 : vector<1x32xf32> to vector<16x32xf32>
    %44 = arith.addf %41, %43 : vector<16x32xf32>
    %45 = vector.extract_strided_slice %44 {offsets = [0, 0], sizes = [16, 8], strides = [1, 1]} : vector<16x32xf32> to vector<16x8xf32>
    %46 = vector.extract_strided_slice %44 {offsets = [0, 8], sizes = [16, 8], strides = [1, 1]} : vector<16x32xf32> to vector<16x8xf32>
    %47 = vector.extract_strided_slice %44 {offsets = [0, 16], sizes = [16, 8], strides = [1, 1]} : vector<16x32xf32> to vector<16x8xf32>
    %48 = vector.extract_strided_slice %44 {offsets = [0, 24], sizes = [16, 8], strides = [1, 1]} : vector<16x32xf32> to vector<16x8xf32>
    %49 = tpu.transpose %47, [1, 0] : vector<16x8xf32> -> vector<8x16xf32>
    %cst_18 = arith.constant dense<0.000000e+00> : vector<16x16xf32>
    %50 = tpu.matmul %46, %49, %cst_18 {dimension_numbers = #tpu.dot_dimension_numbers<[1], [0], [0], [1], [0, 0, 1, 1], [], []>} : vector<16x8xf32>, vector<8x16xf32>, vector<16x16xf32> -> vector<16x16xf32>
    %cst_19 = arith.constant dense<0xFF800000> : vector<16xf32>
    %51 = vector.multi_reduction <maximumf>, %50, %cst_19 [1] : vector<16x16xf32> to vector<16xf32>
    %52 = vector.shape_cast %51 : vector<16xf32> to vector<16x1xf32>
    %53 = vector.broadcast %52 : vector<16x1xf32> to vector<16x16xf32>
    %54 = arith.subf %50, %53 : vector<16x16xf32>
    %55 = math.exp %54 : vector<16x16xf32>
    %cst_20 = arith.constant dense<0.000000e+00> : vector<16xf32>
    %56 = vector.multi_reduction <add>, %55, %cst_20 [1] : vector<16x16xf32> to vector<16xf32>
    %57 = vector.shape_cast %56 : vector<16xf32> to vector<16x1xf32>
    %58 = tpu.reciprocal %57 {approx = true} : vector<16x1xf32> -> vector<16x1xf32>
    %59 = vector.broadcast %58 : vector<16x1xf32> to vector<16x16xf32>
    %60 = arith.mulf %55, %59 : vector<16x16xf32>
    %cst_21 = arith.constant dense<0.000000e+00> : vector<16x8xf32>
    %61 = tpu.matmul %60, %48, %cst_21 {dimension_numbers = #tpu.dot_dimension_numbers<[1], [0], [0], [1], [0, 0, 1, 1], [], []>} : vector<16x16xf32>, vector<16x8xf32>, vector<16x8xf32> -> vector<16x8xf32>
    %cst_22 = arith.constant dense<0.000000e+00> : vector<16x8xf32>
    %62 = tpu.matmul %1, %45, %cst_22 {dimension_numbers = #tpu.dot_dimension_numbers<[1], [0], [0], [1], [0, 0, 1, 1], [], []>} : vector<16x16xf32>, vector<16x8xf32>, vector<16x8xf32> -> vector<16x8xf32>
    %63 = arith.addf %62, %61 : vector<16x8xf32>
    %c5 = arith.constant 5 : index
    %c640_23 = arith.constant 640 : index
    %64 = vector.load %arg1[%c5, %c640_23] : memref<16x768xf32, #tpu.memory_space<vmem>>, vector<1x8xf32>
    %65 = vector.broadcast %64 : vector<1x8xf32> to vector<16x8xf32>
    %66 = arith.mulf %37, %65 : vector<16x8xf32>
    %67 = arith.addf %63, %66 : vector<16x8xf32>
    %c6 = arith.constant 6 : index
    %c640_24 = arith.constant 640 : index
    %68 = vector.load %arg1[%c6, %c640_24] : memref<16x768xf32, #tpu.memory_space<vmem>>, vector<1x8xf32>
    %69 = vector.broadcast %68 : vector<1x8xf32> to vector<16x8xf32>
    %70 = arith.addf %67, %69 : vector<16x8xf32>
    %cst_25 = arith.constant dense<0.000000e+00> : vector<16x16xf32>
    %71 = tpu.matmul %70, %39, %cst_25 {dimension_numbers = #tpu.dot_dimension_numbers<[1], [0], [0], [1], [0, 0, 1, 1], [], []>} : vector<16x8xf32>, vector<8x16xf32>, vector<16x16xf32> -> vector<16x16xf32>
    %c7 = arith.constant 7 : index
    %c640_26 = arith.constant 640 : index
    %72 = vector.load %arg1[%c7, %c640_26] : memref<16x768xf32, #tpu.memory_space<vmem>>, vector<1x16xf32>
    %73 = vector.broadcast %72 : vector<1x16xf32> to vector<16x16xf32>
    %74 = arith.addf %71, %73 : vector<16x16xf32>
    %cst_27 = arith.constant 0.000000e+00 : f32
    %75 = vector.broadcast %cst_27 : f32 to vector<16x16xf32>
    %76 = arith.maximumf %74, %75 : vector<16x16xf32>
    %cst_28 = arith.constant dense<0.000000e+00> : vector<16x8xf32>
    %77 = tpu.matmul %76, %40, %cst_28 {dimension_numbers = #tpu.dot_dimension_numbers<[1], [0], [0], [1], [0, 0, 1, 1], [], []>} : vector<16x16xf32>, vector<16x8xf32>, vector<16x8xf32> -> vector<16x8xf32>
    %c8 = arith.constant 8 : index
    %c640_29 = arith.constant 640 : index
    %78 = vector.load %arg1[%c8, %c640_29] : memref<16x768xf32, #tpu.memory_space<vmem>>, vector<1x8xf32>
    %79 = vector.broadcast %78 : vector<1x8xf32> to vector<16x8xf32>
    %80 = arith.mulf %70, %79 : vector<16x8xf32>
    %81 = arith.addf %80, %77 : vector<16x8xf32>
    %c9 = arith.constant 9 : index
    %c640_30 = arith.constant 640 : index
    %82 = vector.load %arg1[%c9, %c640_30] : memref<16x768xf32, #tpu.memory_space<vmem>>, vector<1x8xf32>
    %83 = vector.broadcast %82 : vector<1x8xf32> to vector<16x8xf32>
    %84 = arith.addf %81, %83 : vector<16x8xf32>
    %c0_31 = arith.constant 0 : index
    %c0_32 = arith.constant 0 : index
    %85 = vector.load %arg1[%c0_31, %c0_32] : memref<16x768xf32, #tpu.memory_space<vmem>>, vector<8x128xf32>
    %c10 = arith.constant 10 : index
    %c640_33 = arith.constant 640 : index
    %86 = vector.load %arg1[%c10, %c640_33] : memref<16x768xf32, #tpu.memory_space<vmem>>, vector<1x128xf32>
    %cst_34 = arith.constant dense<0.000000e+00> : vector<16x128xf32>
    %87 = tpu.matmul %84, %85, %cst_34 {dimension_numbers = #tpu.dot_dimension_numbers<[1], [0], [0], [1], [0, 0, 1, 1], [], []>} : vector<16x8xf32>, vector<8x128xf32>, vector<16x128xf32> -> vector<16x128xf32>
    %88 = vector.broadcast %86 : vector<1x128xf32> to vector<16x128xf32>
    %89 = arith.addf %87, %88 : vector<16x128xf32>
    %c0_35 = arith.constant 0 : index
    %c0_36 = arith.constant 0 : index
    %90 = vector.load %arg2[%c0_35, %c0_36] : memref<16x128xf32, #tpu.memory_space<vmem>>, vector<16x128xf32>
    tpu.vector_store %arg2[%c0_35, %c0_36], %89 {strides = array<i32>} : memref<16x128xf32, #tpu.memory_space<vmem>>, vector<16x128xf32>,
    return
  }
}

</mosaic_0001>

<llo_original>
// kernel: gps_forward.1
$region0: #{gps_forward.1}
  #allocation0 [shape = 'u32[]', space=smem, size = 0x4, offset = 0x4, fixed_abs, tag = 'smem constant byte address 0x4 - core index']
  #allocation1 [shape = 'u32[144,128]{1,0:T(1,128)}', space=vmem, size = 0x12000, scoped, tag = 'internal scratch']
  %s0 = inlined_call_operand.vmem [shape: f32[16,256], index: 0, kind: input, shape index: {}]
  %s1 = inlined_call_operand.vmem [shape: f32[16,768], index: 1, kind: input, shape index: {}]
  %s2 = inlined_call_operand.vmem [shape: f32[16,128], index: 2, kind: output, shape index: {}]
  %s3 = sld [smem:[#allocation0]]
  $region18: #{gps_forward.1} parent=0
    _
  %s5 = ssub.s32 1, %s3
  %s6 = scalar_select 0, %s5, %s3
  // Predicated region
  $region2: #{gps_forward.1} parent=0 // pred_check
    _
  $region3: #{gps_forward.1} parent=0 // pred_check_branch
    %8 = sbr.rel (0) target = $region5
  $region4: #{gps_forward.1} parent=0 // pred_region
    _
  $region5: #{gps_forward.1} parent=0 // pred_fallthru
    _
  // Predicated region
  $region6: #{gps_forward.1} parent=0 // pred_check
    _
  $region7: #{gps_forward.1} parent=0 // pred_check_branch
    %10 = sbr.rel (0) target = $region9
  $region8: #{gps_forward.1} parent=0 // pred_region
    _
  $region9: #{gps_forward.1} parent=0 // pred_fallthru
    _
  %v11 = vld [vmem:[%s0] sm:$0xff]
  %v12 = vld [vmem:[%s0 + $0x10] sm:$0xff]
  %v13 = vld [vmem:[%s0 + $0x8] sm:$0xff]
  %v14 = vld [vmem:[%s0 + $0x18] sm:$0xff]
  %v15 = vld [vmem:[%s1 + $0x8] sm:$0xff]
  %v16 = vld [vmem:[%s1 + $0x38] sm:$0xff]
  %v17 = vld [vmem:[%s1 + $0x28] ss:$0 sm:$0xff]
  %vm18 = vcmask 130048
  %v20 = vsel %vm18, %v11, 0
  %v23 = vsel %vm18, %v12, 0
  %25 = vmatprep.subr.mxu0 0.0
  %26 = vmatpush1.msra.mxu0 0.0
  %27 = vmatprep.subr.mxu0 0.0
  %28 = vmatpush1.msra.mxu0 0.0
  %29 = vmatprep.subr.mxu0 0.0
  %30 = vmatpush1.msra.mxu0 0.0
  %31 = vmatprep.subr.mxu0 0.0
  %32 = vmatpush1.msra.mxu0 0.0
  %33 = vmatprep.subr.mxu0 0.0
  %34 = vmatpush1.msra.mxu0 0.0
  %35 = vmatprep.subr.mxu0 0.0
  %36 = vmatpush1.msra.mxu0 0.0
  %37 = vmatprep.subr.mxu0 0.0
  %38 = vmatpush1.msra.mxu0 0.0
  %39 = vmatprep.subr.mxu0 0.0
  %40 = vmatpush1.msra.mxu0 0.0
  %41 = vmatprep.subr.mxu0 0.0
  %42 = vmatpush1.msra.mxu0 0.0
  %43 = vmatprep.subr.mxu0 0.0
  %44 = vmatpush1.msra.mxu0 0.0
  %45 = vmatprep.subr.mxu0 0.0
  %46 = vmatpush1.msra.mxu0 0.0
  %47 = vmatprep.subr.mxu0 0.0
  %48 = vmatpush1.msra.mxu0 0.0
  %49 = vmatprep.subr.mxu0 0.0
  %50 = vmatpush1.msra.mxu0 0.0
  %51 = vmatprep.subr.mxu0 0.0
  %52 = vmatpush1.msra.mxu0 0.0
  %53 = vmatprep.subr.mxu0 0.0
  %54 = vmatpush1.msra.mxu0 %v16
  %55 = vmatprep.subr.mxu0 0.0
  %56 = vmatpush1.msra.mxu0 %v15
  %57 = vmatprep.subr.mxu0 0.0
  %58 = vmatpush2.msra.mxu0 0.0
  %59 = vmatprep.subr.mxu0 0.0
  %60 = vmatpush2.msra.mxu0 0.0
  %61 = vmatprep.subr.mxu0 0.0
  %62 = vmatpush2.msra.mxu0 0.0
  %63 = vmatprep.subr.mxu0 0.0
  %64 = vmatpush2.msra.mxu0 0.0
  %65 = vmatprep.subr.mxu0 0.0
  %66 = vmatpush2.msra.mxu0 0.0
  %67 = vmatprep.subr.mxu0 0.0
  %68 = vmatpush2.msra.mxu0 0.0
  %69 = vmatprep.subr.mxu0 0.0
  %70 = vmatpush2.msra.mxu0 0.0
  %71 = vmatprep.subr.mxu0 0.0
  %72 = vmatpush2.msra.mxu0 0.0
  %73 = vmatprep.subr.mxu0 0.0
  %74 = vmatpush2.msra.mxu0 0.0
  %75 = vmatprep.subr.mxu0 0.0
  %76 = vmatpush2.msra.mxu0 0.0
  %77 = vmatprep.subr.mxu0 0.0
  %78 = vmatpush2.msra.mxu0 0.0
  %79 = vmatprep.subr.mxu0 0.0
  %80 = vmatpush2.msra.mxu0 0.0
  %81 = vmatprep.subr.mxu0 0.0
  %82 = vmatpush2.msra.mxu0 0.0
  %83 = vmatprep.subr.mxu0 0.0
  %84 = vmatpush2.msra.mxu0 0.0
  %85 = vmatprep.subr.mxu0 0.0
  %86 = vmatpush2.msra.mxu0 0.0
  %87 = vmatprep.subr.mxu0 0.0
  %88 = vmatpush2.msra.mxu0 0.0
  %89 = vmatprep.mubr.f32.mxu0 0.0
  %90 = vmatmul.mubr.f32.gmra.mxu0 %v20
  %v91 = vpop.f32.mrf.mxu0
  %v92 = vadd.f32 %v17, %v91
  %v93 = vpop.f32.mrf.mxu0
  %94 = vmatprep.mubr.f32.mxu0 0.0
  %95 = vmatmul.mubr.f32.gmra.mxu0 %v23
  %v96 = vpop.f32.mrf.mxu0
  %v97 = vadd.f32 %v17, %v96
  %v98 = vpop.f32.mrf.mxu0
  %99 = vdwg.mxu0
  %v100 = vld [vmem:[%s1 + $0x29] ss:$0 sm:$0xff]
  %v101 = vld [vmem:[%s1 + $0x2a] ss:$0 sm:$0xff]
  %v102 = vld [vmem:[%s1 + $0x2b] ss:$0 sm:$0xff]
  %v103 = vmul.f32 %v92, %v102
  %v104 = vmul.f32 %v97, %v102
  %vm105 = vcmask 64512
  %v106 = vsel %vm105, %v103, 0.0
  %107 = vadd.xlane.f32.xlu0 %v106
  %v108 = vpop.xlane.xlu0 %107
  %v109 = vsel %vm105, %v104, 0.0
  %110 = vadd.xlane.f32.xlu0 %v109
  %v111 = vpop.xlane.xlu0 %110
  %v112 = vmul.f32 %v108, 0.25
  %v113 = vmul.f32 %v111, 0.25
  %v114 = vsub.f32 %v92, %v112
  %v115 = vsub.f32 %v97, %v113
  %v116 = vmul.f32 %v114, %v114
  %v117 = vmul.f32 %v115, %v115
  %v118 = vmul.f32 %v116, %v102
  %v119 = vmul.f32 %v117, %v102
  %v120 = vsel %vm105, %v118, 0.0
  %121 = vadd.xlane.f32.xlu0 %v120
  %v122 = vpop.xlane.xlu0 %121
  %v123 = vsel %vm105, %v119, 0.0
  %124 = vadd.xlane.f32.xlu0 %v123
  %v125 = vpop.xlane.xlu0 %124
  %v126 = vmul.f32 %v122, 0.25
  %v127 = vmul.f32 %v125, 0.25
  %v128 = vadd.f32 %v126, 1e-05
  %v129 = vadd.f32 %v127, 1e-05
  %v130 = vrsqrt.pop %v128
  %v131 = vrsqrt.pop %v129
  %v132 = vmul.f32 %v114, %v130
  %v133 = vmul.f32 %v115, %v131
  %v134 = vmul.f32 %v132, %v100
  %v135 = vmul.f32 %v133, %v100
  %v136 = vadd.f32 %v134, %v101
  %v137 = vadd.f32 %v135, %v101
  %v138 = vsub.f32 %v136, %v92
  %v139 = vsub.f32 %v137, %v97
  %v140 = vmul.f32 %v102, %v138
  %v141 = vmul.f32 %v102, %v139
  %v142 = vadd.f32 %v92, %v140
  %v143 = vadd.f32 %v97, %v141
  %v144 = vld [vmem:[%s1 + $0x10] sm:$0xff]
  %v145 = vld [vmem:[%s1 + $0x18] sm:$0xff]
  %v146 = vld [vmem:[%s1 + $0x20] sm:$0xff]
  %v147 = vld [vmem:[%s1 + $0x50] sm:$0xff]
  %v148 = vld [vmem:[%s1 + $0x2c] ss:$0 sm:$0xff]
  %v150 = vsel %vm105, %v142, 0
  %v153 = vsel %vm105, %v143, 0
  %155 = vmatprep.subr.mxu0 0.0
  %156 = vmatpush1.msra.mxu0 0.0
  %157 = vmatprep.subr.mxu0 0.0
  %158 = vmatpush1.msra.mxu0 0.0
  %159 = vmatprep.subr.mxu0 0.0
  %160 = vmatpush1.msra.mxu0 0.0
  %161 = vmatprep.subr.mxu0 0.0
  %162 = vmatpush1.msra.mxu0 0.0
  %163 = vmatprep.subr.mxu0 0.0
  %164 = vmatpush1.msra.mxu0 0.0
  %165 = vmatprep.subr.mxu0 0.0
  %166 = vmatpush1.msra.mxu0 0.0
  %167 = vmatprep.subr.mxu0 0.0
  %168 = vmatpush1.msra.mxu0 0.0
  %169 = vmatprep.subr.mxu0 0.0
  %170 = vmatpush1.msra.mxu0 0.0
  %171 = vmatprep.subr.mxu0 0.0
  %172 = vmatpush1.msra.mxu0 0.0
  %173 = vmatprep.subr.mxu0 0.0
  %174 = vmatpush1.msra.mxu0 0.0
  %175 = vmatprep.subr.mxu0 0.0
  %176 = vmatpush1.msra.mxu0 0.0
  %177 = vmatprep.subr.mxu0 0.0
  %178 = vmatpush1.msra.mxu0 0.0
  %179 = vmatprep.subr.mxu0 0.0
  %180 = vmatpush1.msra.mxu0 0.0
  %181 = vmatprep.subr.mxu0 0.0
  %182 = vmatpush1.msra.mxu0 0.0
  %183 = vmatprep.subr.mxu0 0.0
  %184 = vmatpush1.msra.mxu0 0.0
  %185 = vmatprep.subr.mxu0 0.0
  %186 = vmatpush1.msra.mxu0 %v144
  %187 = vmatprep.subr.mxu0 0.0
  %188 = vmatpush2.msra.mxu0 0.0
  %189 = vmatprep.subr.mxu0 0.0
  %190 = vmatpush2.msra.mxu0 0.0
  %191 = vmatprep.subr.mxu0 0.0
  %192 = vmatpush2.msra.mxu0 0.0
  %193 = vmatprep.subr.mxu0 0.0
  %194 = vmatpush2.msra.mxu0 0.0
  %195 = vmatprep.subr.mxu0 0.0
  %196 = vmatpush2.msra.mxu0 0.0
  %197 = vmatprep.subr.mxu0 0.0
  %198 = vmatpush2.msra.mxu0 0.0
  %199 = vmatprep.subr.mxu0 0.0
  %200 = vmatpush2.msra.mxu0 0.0
  %201 = vmatprep.subr.mxu0 0.0
  %202 = vmatpush2.msra.mxu0 0.0
  %203 = vmatprep.subr.mxu0 0.0
  %204 = vmatpush2.msra.mxu0 0.0
  %205 = vmatprep.subr.mxu0 0.0
  %206 = vmatpush2.msra.mxu0 0.0
  %207 = vmatprep.subr.mxu0 0.0
  %208 = vmatpush2.msra.mxu0 0.0
  %209 = vmatprep.subr.mxu0 0.0
  %210 = vmatpush2.msra.mxu0 0.0
  %211 = vmatprep.subr.mxu0 0.0
  %212 = vmatpush2.msra.mxu0 0.0
  %213 = vmatprep.subr.mxu0 0.0
  %214 = vmatpush2.msra.mxu0 0.0
  %215 = vmatprep.subr.mxu0 0.0
  %216 = vmatpush2.msra.mxu0 0.0
  %217 = vmatprep.subr.mxu0 0.0
  %218 = vmatpush2.msra.mxu0 0.0
  %219 = vmatprep.mubr.f32.mxu0 0.0
  %220 = vmatmul.mubr.f32.gmra.mxu0 %v150
  %v221 = vpop.f32.mrf.mxu0
  %v222 = vadd.f32 %v148, %v221
  %v223 = vpop.f32.mrf.mxu0
  %224 = vmatprep.mubr.f32.mxu0 0.0
  %225 = vmatmul.mubr.f32.gmra.mxu0 %v153
  %v226 = vpop.f32.mrf.mxu0
  %v227 = vadd.f32 %v148, %v226
  %v228 = vpop.f32.mrf.mxu0
  %229 = vdwg.mxu0
  %232 = vrot.lane.b32.xlu0 %v222, 120
  %v233 = vpop.permute.xlu0 %232
  %234 = vrot.lane.b32.xlu0 %v227, 120
  %v235 = vpop.permute.xlu0 %234
  %236 = vrot.lane.b32.xlu0 %v222, 112
  %v237 = vpop.permute.xlu0 %236
  %238 = vrot.lane.b32.xlu0 %v227, 112
  %v239 = vpop.permute.xlu0 %238
  %v240 = vsel %vm105, %v233, 0
  %v242 = vsel %vm105, %v235, 0
  %v244 = vsel %vm105, %v237, 0
  %v246 = vsel %vm105, %v239, 0
  %248 = vmatprep.subr.mxu0 0.0
  %249 = vmatpush1.xpose.msra.mxu0 0.0
  %250 = vmatprep.subr.mxu0 0.0
  %251 = vmatpush1.xpose.msra.mxu0 0.0
  %252 = vmatprep.subr.mxu0 0.0
  %253 = vmatpush1.xpose.msra.mxu0 0.0
  %254 = vmatprep.subr.mxu0 0.0
  %255 = vmatpush1.xpose.msra.mxu0 0.0
  %256 = vmatprep.subr.mxu0 0.0
  %257 = vmatpush1.xpose.msra.mxu0 0.0
  %258 = vmatprep.subr.mxu0 0.0
  %259 = vmatpush1.xpose.msra.mxu0 0.0
  %260 = vmatprep.subr.mxu0 0.0
  %261 = vmatpush1.xpose.msra.mxu0 0.0
  %262 = vmatprep.subr.mxu0 0.0
  %263 = vmatpush1.xpose.msra.mxu0 0.0
  %264 = vmatprep.subr.mxu0 0.0
  %265 = vmatpush1.xpose.msra.mxu0 0.0
  %266 = vmatprep.subr.mxu0 0.0
  %267 = vmatpush1.xpose.msra.mxu0 0.0
  %268 = vmatprep.subr.mxu0 0.0
  %269 = vmatpush1.xpose.msra.mxu0 0.0
  %270 = vmatprep.subr.mxu0 0.0
  %271 = vmatpush1.xpose.msra.mxu0 0.0
  %272 = vmatprep.subr.mxu0 0.0
  %273 = vmatpush1.xpose.msra.mxu0 0.0
  %274 = vmatprep.subr.mxu0 0.0
  %275 = vmatpush1.xpose.msra.mxu0 0.0
  %276 = vmatprep.subr.mxu0 0.0
  %277 = vmatpush1.xpose.msra.mxu0 %v246
  %278 = vmatprep.subr.mxu0 0.0
  %279 = vmatpush1.xpose.msra.mxu0 %v244
  %280 = vmatprep.subr.mxu0 0.0
  %281 = vmatpush2.xpose.msra.mxu0 0.0
  %282 = vmatprep.subr.mxu0 0.0
  %283 = vmatpush2.xpose.msra.mxu0 0.0
  %284 = vmatprep.subr.mxu0 0.0
  %285 = vmatpush2.xpose.msra.mxu0 0.0
  %286 = vmatprep.subr.mxu0 0.0
  %287 = vmatpush2.xpose.msra.mxu0 0.0
  %288 = vmatprep.subr.mxu0 0.0
  %289 = vmatpush2.xpose.msra.mxu0 0.0
  %290 = vmatprep.subr.mxu0 0.0
  %291 = vmatpush2.xpose.msra.mxu0 0.0
  %292 = vmatprep.subr.mxu0 0.0
  %293 = vmatpush2.xpose.msra.mxu0 0.0
  %294 = vmatprep.subr.mxu0 0.0
  %295 = vmatpush2.xpose.msra.mxu0 0.0
  %296 = vmatprep.subr.mxu0 0.0
  %297 = vmatpush2.xpose.msra.mxu0 0.0
  %298 = vmatprep.subr.mxu0 0.0
  %299 = vmatpush2.xpose.msra.mxu0 0.0
  %300 = vmatprep.subr.mxu0 0.0
  %301 = vmatpush2.xpose.msra.mxu0 0.0
  %302 = vmatprep.subr.mxu0 0.0
  %303 = vmatpush2.xpose.msra.mxu0 0.0
  %304 = vmatprep.subr.mxu0 0.0
  %305 = vmatpush2.xpose.msra.mxu0 0.0
  %306 = vmatprep.subr.mxu0 0.0
  %307 = vmatpush2.xpose.msra.mxu0 0.0
  %308 = vmatprep.subr.mxu0 0.0
  %309 = vmatpush2.xpose.msra.mxu0 0.0
  %310 = vmatprep.subr.mxu0 0.0
  %311 = vmatpush2.xpose.msra.mxu0 0.0
  %312 = vmatprep.mubr.f32.mxu0 0.0
  %313 = vmatmul.mubr.f32.gmra.mxu0 %v240
  %v314 = vpop.f32.mrf.mxu0
  %v315 = vadd.f32 0.0, %v314
  %v316 = vpop.f32.mrf.mxu0
  %317 = vmatprep.mubr.f32.mxu0 0.0
  %318 = vmatmul.mubr.f32.gmra.mxu0 %v242
  %v319 = vpop.f32.mrf.mxu0
  %v320 = vadd.f32 0.0, %v319
  %v321 = vpop.f32.mrf.mxu0
  %322 = vdwg.mxu0
  %v323 = vsel %vm18, %v315, -inf
  %324 = vmax.xlane.f32.xlu0 %v323
  %v325 = vpop.xlane.xlu0 %324
  %v326 = vsel %vm18, %v320, -inf
  %327 = vmax.xlane.f32.xlu0 %v326
  %v328 = vpop.xlane.xlu0 %327
  %v329 = vsub.f32 %v315, %v325
  %v330 = vsub.f32 %v320, %v328
  %v331 = vmul.f32 %v329, 1.442695
  %v332 = vpow.pop %v331
  %v333 = vmul.f32 %v330, 1.442695
  %v334 = vpow.pop %v333
  %v335 = vsel %vm18, %v332, 0.0
  %336 = vadd.xlane.f32.xlu0 %v335
  %v337 = vpop.xlane.xlu0 %336
  %v338 = vsel %vm18, %v334, 0.0
  %339 = vadd.xlane.f32.xlu0 %v338
  %v340 = vpop.xlane.xlu0 %339
  %v341 = vrcp.pop %v337
  %v342 = vrcp.pop %v340
  %v343 = vmul.f32 %v332, %v341
  %v344 = vmul.f32 %v334, %v342
  %345 = vrot.lane.b32.xlu0 %v222, 104
  %v346 = vpop.permute.xlu0 %345
  %347 = vrot.lane.b32.xlu0 %v227, 104
  %v348 = vpop.permute.xlu0 %347
  %v352 = vsel %vm18, %v343, 0
  %v355 = vsel %vm18, %v344, 0
  %357 = vmatprep.subr.mxu0 0.0
  %358 = vmatpush1.msra.mxu0 0.0
  %359 = vmatprep.subr.mxu0 0.0
  %360 = vmatpush1.msra.mxu0 0.0
  %361 = vmatprep.subr.mxu0 0.0
  %362 = vmatpush1.msra.mxu0 0.0
  %363 = vmatprep.subr.mxu0 0.0
  %364 = vmatpush1.msra.mxu0 0.0
  %365 = vmatprep.subr.mxu0 0.0
  %366 = vmatpush1.msra.mxu0 0.0
  %367 = vmatprep.subr.mxu0 0.0
  %368 = vmatpush1.msra.mxu0 0.0
  %369 = vmatprep.subr.mxu0 0.0
  %370 = vmatpush1.msra.mxu0 0.0
  %371 = vmatprep.subr.mxu0 0.0
  %372 = vmatpush1.msra.mxu0 0.0
  %373 = vmatprep.subr.mxu0 0.0
  %374 = vmatpush1.msra.mxu0 0.0
  %375 = vmatprep.subr.mxu0 0.0
  %376 = vmatpush1.msra.mxu0 0.0
  %377 = vmatprep.subr.mxu0 0.0
  %378 = vmatpush1.msra.mxu0 0.0
  %379 = vmatprep.subr.mxu0 0.0
  %380 = vmatpush1.msra.mxu0 0.0
  %381 = vmatprep.subr.mxu0 0.0
  %382 = vmatpush1.msra.mxu0 0.0
  %383 = vmatprep.subr.mxu0 0.0
  %384 = vmatpush1.msra.mxu0 0.0
  %385 = vmatprep.subr.mxu0 0.0
  %386 = vmatpush1.msra.mxu0 %v348
  %387 = vmatprep.subr.mxu0 0.0
  %388 = vmatpush1.msra.mxu0 %v346
  %389 = vmatprep.subr.mxu0 0.0
  %390 = vmatpush2.msra.mxu0 0.0
  %391 = vmatprep.subr.mxu0 0.0
  %392 = vmatpush2.msra.mxu0 0.0
  %393 = vmatprep.subr.mxu0 0.0
  %394 = vmatpush2.msra.mxu0 0.0
  %395 = vmatprep.subr.mxu0 0.0
  %396 = vmatpush2.msra.mxu0 0.0
  %397 = vmatprep.subr.mxu0 0.0
  %398 = vmatpush2.msra.mxu0 0.0
  %399 = vmatprep.subr.mxu0 0.0
  %400 = vmatpush2.msra.mxu0 0.0
  %401 = vmatprep.subr.mxu0 0.0
  %402 = vmatpush2.msra.mxu0 0.0
  %403 = vmatprep.subr.mxu0 0.0
  %404 = vmatpush2.msra.mxu0 0.0
  %405 = vmatprep.subr.mxu0 0.0
  %406 = vmatpush2.msra.mxu0 0.0
  %407 = vmatprep.subr.mxu0 0.0
  %408 = vmatpush2.msra.mxu0 0.0
  %409 = vmatprep.subr.mxu0 0.0
  %410 = vmatpush2.msra.mxu0 0.0
  %411 = vmatprep.subr.mxu0 0.0
  %412 = vmatpush2.msra.mxu0 0.0
  %413 = vmatprep.subr.mxu0 0.0
  %414 = vmatpush2.msra.mxu0 0.0
  %415 = vmatprep.subr.mxu0 0.0
  %416 = vmatpush2.msra.mxu0 0.0
  %417 = vmatprep.subr.mxu0 0.0
  %418 = vmatpush2.msra.mxu0 0.0
  %419 = vmatprep.subr.mxu0 0.0
  %420 = vmatpush2.msra.mxu0 0.0
  %421 = vmatprep.mubr.f32.mxu0 0.0
  %422 = vmatmul.mubr.f32.gmra.mxu0 %v352
  %v423 = vpop.f32.mrf.mxu0
  %v424 = vadd.f32 0.0, %v423
  %v425 = vpop.f32.mrf.mxu0
  %426 = vmatprep.mubr.f32.mxu0 0.0
  %427 = vmatmul.mubr.f32.gmra.mxu0 %v355
  %v428 = vpop.f32.mrf.mxu0
  %v429 = vadd.f32 0.0, %v428
  %v430 = vpop.f32.mrf.mxu0
  %431 = vdwg.mxu0
  %v433 = vsel %vm18, %v13, 0
  %v436 = vsel %vm18, %v14, 0
  %438 = vmatprep.subr.mxu0 0.0
  %439 = vmatpush1.msra.mxu0 0.0
  %440 = vmatprep.subr.mxu0 0.0
  %441 = vmatpush1.msra.mxu0 0.0
  %442 = vmatprep.subr.mxu0 0.0
  %443 = vmatpush1.msra.mxu0 0.0
  %444 = vmatprep.subr.mxu0 0.0
  %445 = vmatpush1.msra.mxu0 0.0
  %446 = vmatprep.subr.mxu0 0.0
  %447 = vmatpush1.msra.mxu0 0.0
  %448 = vmatprep.subr.mxu0 0.0
  %449 = vmatpush1.msra.mxu0 0.0
  %450 = vmatprep.subr.mxu0 0.0
  %451 = vmatpush1.msra.mxu0 0.0
  %452 = vmatprep.subr.mxu0 0.0
  %453 = vmatpush1.msra.mxu0 0.0
  %454 = vmatprep.subr.mxu0 0.0
  %455 = vmatpush1.msra.mxu0 0.0
  %456 = vmatprep.subr.mxu0 0.0
  %457 = vmatpush1.msra.mxu0 0.0
  %458 = vmatprep.subr.mxu0 0.0
  %459 = vmatpush1.msra.mxu0 0.0
  %460 = vmatprep.subr.mxu0 0.0
  %461 = vmatpush1.msra.mxu0 0.0
  %462 = vmatprep.subr.mxu0 0.0
  %463 = vmatpush1.msra.mxu0 0.0
  %464 = vmatprep.subr.mxu0 0.0
  %465 = vmatpush1.msra.mxu0 0.0
  %466 = vmatprep.subr.mxu0 0.0
  %467 = vmatpush1.msra.mxu0 %v227
  %468 = vmatprep.subr.mxu0 0.0
  %469 = vmatpush1.msra.mxu0 %v222
  %470 = vmatprep.subr.mxu0 0.0
  %471 = vmatpush2.msra.mxu0 0.0
  %472 = vmatprep.subr.mxu0 0.0
  %473 = vmatpush2.msra.mxu0 0.0
  %474 = vmatprep.subr.mxu0 0.0
  %475 = vmatpush2.msra.mxu0 0.0
  %476 = vmatprep.subr.mxu0 0.0
  %477 = vmatpush2.msra.mxu0 0.0
  %478 = vmatprep.subr.mxu0 0.0
  %479 = vmatpush2.msra.mxu0 0.0
  %480 = vmatprep.subr.mxu0 0.0
  %481 = vmatpush2.msra.mxu0 0.0
  %482 = vmatprep.subr.mxu0 0.0
  %483 = vmatpush2.msra.mxu0 0.0
  %484 = vmatprep.subr.mxu0 0.0
  %485 = vmatpush2.msra.mxu0 0.0
  %486 = vmatprep.subr.mxu0 0.0
  %487 = vmatpush2.msra.mxu0 0.0
  %488 = vmatprep.subr.mxu0 0.0
  %489 = vmatpush2.msra.mxu0 0.0
  %490 = vmatprep.subr.mxu0 0.0
  %491 = vmatpush2.msra.mxu0 0.0
  %492 = vmatprep.subr.mxu0 0.0
  %493 = vmatpush2.msra.mxu0 0.0
  %494 = vmatprep.subr.mxu0 0.0
  %495 = vmatpush2.msra.mxu0 0.0
  %496 = vmatprep.subr.mxu0 0.0
  %497 = vmatpush2.msra.mxu0 0.0
  %498 = vmatprep.subr.mxu0 0.0
  %499 = vmatpush2.msra.mxu0 0.0
  %500 = vmatprep.subr.mxu0 0.0
  %501 = vmatpush2.msra.mxu0 0.0
  %502 = vmatprep.mubr.f32.mxu0 0.0
  %503 = vmatmul.mubr.f32.gmra.mxu0 %v433
  %v504 = vpop.f32.mrf.mxu0
  %v505 = vadd.f32 %v424, %v504
  %v506 = vpop.f32.mrf.mxu0
  %507 = vmatprep.mubr.f32.mxu0 0.0
  %508 = vmatmul.mubr.f32.gmra.mxu0 %v436
  %v509 = vpop.f32.mrf.mxu0
  %v510 = vadd.f32 %v429, %v509
  %v511 = vpop.f32.mrf.mxu0
  %512 = vdwg.mxu0
  %v513 = vld [vmem:[%s1 + $0x2d] ss:$0 sm:$0xff]
  %v514 = vmul.f32 %v142, %v513
  %v515 = vmul.f32 %v143, %v513
  %v516 = vadd.f32 %v505, %v514
  %v517 = vadd.f32 %v510, %v515
  %v518 = vld [vmem:[%s1 + $0x2e] ss:$0 sm:$0xff]
  %v519 = vadd.f32 %v516, %v518
  %v520 = vadd.f32 %v517, %v518
  %v521 = vld [vmem:[%s1 + $0x2f] ss:$0 sm:$0xff]
  %v523 = vsel %vm105, %v519, 0
  %v526 = vsel %vm105, %v520, 0
  %528 = vmatprep.subr.mxu0 0.0
  %529 = vmatpush1.msra.mxu0 0.0
  %530 = vmatprep.subr.mxu0 0.0
  %531 = vmatpush1.msra.mxu0 0.0
  %532 = vmatprep.subr.mxu0 0.0
  %533 = vmatpush1.msra.mxu0 0.0
  %534 = vmatprep.subr.mxu0 0.0
  %535 = vmatpush1.msra.mxu0 0.0
  %536 = vmatprep.subr.mxu0 0.0
  %537 = vmatpush1.msra.mxu0 0.0
  %538 = vmatprep.subr.mxu0 0.0
  %539 = vmatpush1.msra.mxu0 0.0
  %540 = vmatprep.subr.mxu0 0.0
  %541 = vmatpush1.msra.mxu0 0.0
  %542 = vmatprep.subr.mxu0 0.0
  %543 = vmatpush1.msra.mxu0 0.0
  %544 = vmatprep.subr.mxu0 0.0
  %545 = vmatpush1.msra.mxu0 0.0
  %546 = vmatprep.subr.mxu0 0.0
  %547 = vmatpush1.msra.mxu0 0.0
  %548 = vmatprep.subr.mxu0 0.0
  %549 = vmatpush1.msra.mxu0 0.0
  %550 = vmatprep.subr.mxu0 0.0
  %551 = vmatpush1.msra.mxu0 0.0
  %552 = vmatprep.subr.mxu0 0.0
  %553 = vmatpush1.msra.mxu0 0.0
  %554 = vmatprep.subr.mxu0 0.0
  %555 = vmatpush1.msra.mxu0 0.0
  %556 = vmatprep.subr.mxu0 0.0
  %557 = vmatpush1.msra.mxu0 0.0
  %558 = vmatprep.subr.mxu0 0.0
  %559 = vmatpush1.msra.mxu0 %v145
  %560 = vmatprep.subr.mxu0 0.0
  %561 = vmatpush2.msra.mxu0 0.0
  %562 = vmatprep.subr.mxu0 0.0
  %563 = vmatpush2.msra.mxu0 0.0
  %564 = vmatprep.subr.mxu0 0.0
  %565 = vmatpush2.msra.mxu0 0.0
  %566 = vmatprep.subr.mxu0 0.0
  %567 = vmatpush2.msra.mxu0 0.0
  %568 = vmatprep.subr.mxu0 0.0
  %569 = vmatpush2.msra.mxu0 0.0
  %570 = vmatprep.subr.mxu0 0.0
  %571 = vmatpush2.msra.mxu0 0.0
  %572 = vmatprep.subr.mxu0 0.0
  %573 = vmatpush2.msra.mxu0 0.0
  %574 = vmatprep.subr.mxu0 0.0
  %575 = vmatpush2.msra.mxu0 0.0
  %576 = vmatprep.subr.mxu0 0.0
  %577 = vmatpush2.msra.mxu0 0.0
  %578 = vmatprep.subr.mxu0 0.0
  %579 = vmatpush2.msra.mxu0 0.0
  %580 = vmatprep.subr.mxu0 0.0
  %581 = vmatpush2.msra.mxu0 0.0
  %582 = vmatprep.subr.mxu0 0.0
  %583 = vmatpush2.msra.mxu0 0.0
  %584 = vmatprep.subr.mxu0 0.0
  %585 = vmatpush2.msra.mxu0 0.0
  %586 = vmatprep.subr.mxu0 0.0
  %587 = vmatpush2.msra.mxu0 0.0
  %588 = vmatprep.subr.mxu0 0.0
  %589 = vmatpush2.msra.mxu0 0.0
  %590 = vmatprep.subr.mxu0 0.0
  %591 = vmatpush2.msra.mxu0 0.0
  %592 = vmatprep.mubr.f32.mxu0 0.0
  %593 = vmatmul.mubr.f32.gmra.mxu0 %v523
  %v594 = vpop.f32.mrf.mxu0
  %v595 = vadd.f32 %v521, %v594
  %v596 = vpop.f32.mrf.mxu0
  %597 = vmatprep.mubr.f32.mxu0 0.0
  %598 = vmatmul.mubr.f32.gmra.mxu0 %v526
  %v599 = vpop.f32.mrf.mxu0
  %v600 = vadd.f32 %v521, %v599
  %v601 = vpop.f32.mrf.mxu0
  %602 = vdwg.mxu0
  %v603 = vmax.f32 %v595, 0.0
  %v604 = vmax.f32 %v600, 0.0
  %v606 = vsel %vm18, %v603, 0
  %v609 = vsel %vm18, %v604, 0
  %611 = vmatprep.subr.mxu0 0.0
  %612 = vmatpush1.msra.mxu0 0.0
  %613 = vmatprep.subr.mxu0 0.0
  %614 = vmatpush1.msra.mxu0 0.0
  %615 = vmatprep.subr.mxu0 0.0
  %616 = vmatpush1.msra.mxu0 0.0
  %617 = vmatprep.subr.mxu0 0.0
  %618 = vmatpush1.msra.mxu0 0.0
  %619 = vmatprep.subr.mxu0 0.0
  %620 = vmatpush1.msra.mxu0 0.0
  %621 = vmatprep.subr.mxu0 0.0
  %622 = vmatpush1.msra.mxu0 0.0
  %623 = vmatprep.subr.mxu0 0.0
  %624 = vmatpush1.msra.mxu0 0.0
  %625 = vmatprep.subr.mxu0 0.0
  %626 = vmatpush1.msra.mxu0 0.0
  %627 = vmatprep.subr.mxu0 0.0
  %628 = vmatpush1.msra.mxu0 0.0
  %629 = vmatprep.subr.mxu0 0.0
  %630 = vmatpush1.msra.mxu0 0.0
  %631 = vmatprep.subr.mxu0 0.0
  %632 = vmatpush1.msra.mxu0 0.0
  %633 = vmatprep.subr.mxu0 0.0
  %634 = vmatpush1.msra.mxu0 0.0
  %635 = vmatprep.subr.mxu0 0.0
  %636 = vmatpush1.msra.mxu0 0.0
  %637 = vmatprep.subr.mxu0 0.0
  %638 = vmatpush1.msra.mxu0 0.0
  %639 = vmatprep.subr.mxu0 0.0
  %640 = vmatpush1.msra.mxu0 %v147
  %641 = vmatprep.subr.mxu0 0.0
  %642 = vmatpush1.msra.mxu0 %v146
  %643 = vmatprep.subr.mxu0 0.0
  %644 = vmatpush2.msra.mxu0 0.0
  %645 = vmatprep.subr.mxu0 0.0
  %646 = vmatpush2.msra.mxu0 0.0
  %647 = vmatprep.subr.mxu0 0.0
  %648 = vmatpush2.msra.mxu0 0.0
  %649 = vmatprep.subr.mxu0 0.0
  %650 = vmatpush2.msra.mxu0 0.0
  %651 = vmatprep.subr.mxu0 0.0
  %652 = vmatpush2.msra.mxu0 0.0
  %653 = vmatprep.subr.mxu0 0.0
  %654 = vmatpush2.msra.mxu0 0.0
  %655 = vmatprep.subr.mxu0 0.0
  %656 = vmatpush2.msra.mxu0 0.0
  %657 = vmatprep.subr.mxu0 0.0
  %658 = vmatpush2.msra.mxu0 0.0
  %659 = vmatprep.subr.mxu0 0.0
  %660 = vmatpush2.msra.mxu0 0.0
  %661 = vmatprep.subr.mxu0 0.0
  %662 = vmatpush2.msra.mxu0 0.0
  %663 = vmatprep.subr.mxu0 0.0
  %664 = vmatpush2.msra.mxu0 0.0
  %665 = vmatprep.subr.mxu0 0.0
  %666 = vmatpush2.msra.mxu0 0.0
  %667 = vmatprep.subr.mxu0 0.0
  %668 = vmatpush2.msra.mxu0 0.0
  %669 = vmatprep.subr.mxu0 0.0
  %670 = vmatpush2.msra.mxu0 0.0
  %671 = vmatprep.subr.mxu0 0.0
  %672 = vmatpush2.msra.mxu0 0.0
  %673 = vmatprep.subr.mxu0 0.0
  %674 = vmatpush2.msra.mxu0 0.0
  %675 = vmatprep.mubr.f32.mxu0 0.0
  %676 = vmatmul.mubr.f32.gmra.mxu0 %v606
  %v677 = vpop.f32.mrf.mxu0
  %v678 = vadd.f32 0.0, %v677
  %v679 = vpop.f32.mrf.mxu0
  %680 = vmatprep.mubr.f32.mxu0 0.0
  %681 = vmatmul.mubr.f32.gmra.mxu0 %v609
  %v682 = vpop.f32.mrf.mxu0
  %v683 = vadd.f32 0.0, %v682
  %v684 = vpop.f32.mrf.mxu0
  %685 = vdwg.mxu0
  %v686 = vld [vmem:[%s1 + $0x58] ss:$0 sm:$0xff]
  %v687 = vmul.f32 %v519, %v686
  %v688 = vmul.f32 %v520, %v686
  %v689 = vadd.f32 %v687, %v678
  %v690 = vadd.f32 %v688, %v683
  %v691 = vld [vmem:[%s1 + $0x59] ss:$0 sm:$0xff]
  %v692 = vadd.f32 %v689, %v691
  %v693 = vadd.f32 %v690, %v691
  %v694 = vld [vmem:[%s1] sm:$0xff]
  %v695 = vld [vmem:[%s1 + $0x5a] ss:$0 sm:$0xff]
  %v697 = vsel %vm105, %v692, 0
  %v700 = vsel %vm105, %v693, 0
  %702 = vmatprep.subr.mxu0 0.0
  %703 = vmatpush1.msra.mxu0 0.0
  %704 = vmatprep.subr.mxu0 0.0
  %705 = vmatpush1.msra.mxu0 0.0
  %706 = vmatprep.subr.mxu0 0.0
  %707 = vmatpush1.msra.mxu0 0.0
  %708 = vmatprep.subr.mxu0 0.0
  %709 = vmatpush1.msra.mxu0 0.0
  %710 = vmatprep.subr.mxu0 0.0
  %711 = vmatpush1.msra.mxu0 0.0
  %712 = vmatprep.subr.mxu0 0.0
  %713 = vmatpush1.msra.mxu0 0.0
  %714 = vmatprep.subr.mxu0 0.0
  %715 = vmatpush1.msra.mxu0 0.0
  %716 = vmatprep.subr.mxu0 0.0
  %717 = vmatpush1.msra.mxu0 0.0
  %718 = vmatprep.subr.mxu0 0.0
  %719 = vmatpush1.msra.mxu0 0.0
  %720 = vmatprep.subr.mxu0 0.0
  %721 = vmatpush1.msra.mxu0 0.0
  %722 = vmatprep.subr.mxu0 0.0
  %723 = vmatpush1.msra.mxu0 0.0
  %724 = vmatprep.subr.mxu0 0.0
  %725 = vmatpush1.msra.mxu0 0.0
  %726 = vmatprep.subr.mxu0 0.0
  %727 = vmatpush1.msra.mxu0 0.0
  %728 = vmatprep.subr.mxu0 0.0
  %729 = vmatpush1.msra.mxu0 0.0
  %730 = vmatprep.subr.mxu0 0.0
  %731 = vmatpush1.msra.mxu0 0.0
  %732 = vmatprep.subr.mxu0 0.0
  %733 = vmatpush1.msra.mxu0 %v694
  %734 = vmatprep.subr.mxu0 0.0
  %735 = vmatpush2.msra.mxu0 0.0
  %736 = vmatprep.subr.mxu0 0.0
  %737 = vmatpush2.msra.mxu0 0.0
  %738 = vmatprep.subr.mxu0 0.0
  %739 = vmatpush2.msra.mxu0 0.0
  %740 = vmatprep.subr.mxu0 0.0
  %741 = vmatpush2.msra.mxu0 0.0
  %742 = vmatprep.subr.mxu0 0.0
  %743 = vmatpush2.msra.mxu0 0.0
  %744 = vmatprep.subr.mxu0 0.0
  %745 = vmatpush2.msra.mxu0 0.0
  %746 = vmatprep.subr.mxu0 0.0
  %747 = vmatpush2.msra.mxu0 0.0
  %748 = vmatprep.subr.mxu0 0.0
  %749 = vmatpush2.msra.mxu0 0.0
  %750 = vmatprep.subr.mxu0 0.0
  %751 = vmatpush2.msra.mxu0 0.0
  %752 = vmatprep.subr.mxu0 0.0
  %753 = vmatpush2.msra.mxu0 0.0
  %754 = vmatprep.subr.mxu0 0.0
  %755 = vmatpush2.msra.mxu0 0.0
  %756 = vmatprep.subr.mxu0 0.0
  %757 = vmatpush2.msra.mxu0 0.0
  %758 = vmatprep.subr.mxu0 0.0
  %759 = vmatpush2.msra.mxu0 0.0
  %760 = vmatprep.subr.mxu0 0.0
  %761 = vmatpush2.msra.mxu0 0.0
  %762 = vmatprep.subr.mxu0 0.0
  %763 = vmatpush2.msra.mxu0 0.0
  %764 = vmatprep.subr.mxu0 0.0
  %765 = vmatpush2.msra.mxu0 0.0
  %766 = vmatprep.mubr.f32.mxu0 0.0
  %767 = vmatmul.mubr.f32.gmra.mxu0 %v697
  %v768 = vpop.f32.mrf.mxu0
  %v769 = vadd.f32 %v695, %v768
  %v770 = vpop.f32.mrf.mxu0
  %771 = vmatprep.mubr.f32.mxu0 0.0
  %772 = vmatmul.mubr.f32.gmra.mxu0 %v700
  %v773 = vpop.f32.mrf.mxu0
  %v774 = vadd.f32 %v695, %v773
  %v775 = vpop.f32.mrf.mxu0
  %776 = vdwg.mxu0
  %777 = vst [vmem:[%s2] sm:$0xff] %v769
  %778 = vst [vmem:[%s2 + $0x8] sm:$0xff] %v774
  // Predicated region
  $region10: #{gps_forward.1} parent=0 // pred_check
    _
  $region11: #{gps_forward.1} parent=0 // pred_check_branch
    %780 = sbr.rel (0) target = $region13
  $region12: #{gps_forward.1} parent=0 // pred_region
    _
  $region13: #{gps_forward.1} parent=0 // pred_fallthru
    _
  // Predicated region
  $region14: #{gps_forward.1} parent=0 // pred_check
    _
  $region15: #{gps_forward.1} parent=0 // pred_check_branch
    %782 = sbr.rel (0) target = $region17
  $region16: #{gps_forward.1} parent=0 // pred_region
    _
  $region17: #{gps_forward.1} parent=0 // pred_fallthru
    _

</llo_original>
